<compile_context>
chip_gen: v5e
topology: v5e:2x2
jax: 0.10.0
libtpu: 0.0.40
codegen_flags: <defaults>
</compile_context>

<pallas_src>
import jax
import jax.numpy as jnp
from jax import lax
from jax.experimental import pallas as pl
from jax.experimental.pallas import tpu as pltpu


def _make_kernel(C, HW, t_hw, lane, num_tiles, neg_slope=0.2):
    n_groups = t_hw // lane
    ragged = (HW % t_hw) != 0
    inv_hw = 1.0 / float(HW)
    # Static geometry of the last (possibly partial) spatial tile.
    n_valid_last = HW - (num_tiles - 1) * t_hw
    full_groups_last = n_valid_last // lane
    rem_last = n_valid_last % lane

    def kernel(x_ref, w1t_ref, w2t_ref, o_ref, sum_acc, max_acc):
        k = pl.program_id(1)
        last = pl.num_programs(1) - 1

        @pl.when(k == 0)
        def _init():
            sum_acc[...] = jnp.zeros_like(sum_acc)
            max_acc[...] = jnp.full_like(max_acc, -jnp.inf)

        def load_group_static(g):
            # Static 128-lane chunk of the current tile: (1, C, lane).
            return x_ref[:, :, g * lane:(g + 1) * lane]

        def accumulate(s, m, ngrp):
            """Fold `ngrp` full lane-groups of the current tile into (s, m)."""
            if ngrp <= 0:
                return s, m
            if ngrp <= 8:
                # Short tiles: fully static unroll, static slices.
                for g in range(ngrp):
                    chunk = load_group_static(g)
                    s = s + chunk.astype(jnp.float32)
                    m = jnp.maximum(m, chunk)
                return s, m

            # Long tiles: bounded-code-size loop, LLO keeps scheduling
            # visibility via partial unroll; aligned dynamic lane offsets.
            def body(g, carry):
                s, m = carry
                off = pl.multiple_of(g * lane, lane)
                chunk = x_ref[:, :, pl.ds(off, lane)]
                return s + chunk.astype(jnp.float32), jnp.maximum(m, chunk)

            return lax.fori_loop(0, ngrp, body, (s, m), unroll=8)

        if not ragged:
            s, m = accumulate(sum_acc[...], max_acc[...], n_groups)
            sum_acc[...] = s
            max_acc[...] = m
        else:
            # Only the last grid step can be ragged; all earlier steps take the
            # unmasked path (no iota / compare / select per chunk).
            @pl.when(k != last)
            def _full_tile():
                s, m = accumulate(sum_acc[...], max_acc[...], n_groups)
                sum_acc[...] = s
                max_acc[...] = m

            @pl.when(k == last)
            def _last_tile():
                s, m = accumulate(sum_acc[...], max_acc[...], full_groups_last)
                if rem_last > 0:
                    idx = lax.broadcasted_iota(jnp.int32, (1, C, lane), 2)
                    valid = idx < rem_last
                    chunk = load_group_static(full_groups_last)
                    s = s + jnp.where(valid, chunk.astype(jnp.float32), 0.0)
                    m = jnp.maximum(
                        m, jnp.where(valid, chunk, jnp.array(-jnp.inf, chunk.dtype)))
                sum_acc[...] = s
                max_acc[...] = m

        @pl.when(k == last)
        def _finalize():
            avg = jnp.sum(sum_acc[...], axis=-1) * inv_hw                 # (1, C)
            mx = jnp.max(max_acc[...].astype(jnp.float32), axis=-1)       # (1, C)
            pooled = jnp.concatenate([avg, mx], axis=0)                   # (2, C)
            w1t = w1t_ref[...].astype(jnp.float32)                        # (C, hid)
            w2t = w2t_ref[...].astype(jnp.float32)                        # (hid, C)
            h = jnp.dot(pooled, w1t, preferred_element_type=jnp.float32)  # (2, hid)
            h = jnp.where(h > 0, h, neg_slope * h)                        # LeakyReLU(0.2)
            y = jnp.dot(h, w2t, preferred_element_type=jnp.float32)       # (2, C)
            out = y[0:1, :] + y[1:2, :]                                   # fc(avg)+fc(max)
            o_ref[0] = jax.nn.sigmoid(out).astype(o_ref.dtype)

    return kernel


def channel_attention(x, w1, w2, *, t_hw=None):
    """x: (B, C, H, W). w1: (hid, C) = conv1 weight squeezed; w2: (C, hid).
    Returns sigmoid(fc(avg_pool(x)) + fc(max_pool(x))) with shape (B, C, 1, 1)."""
    B, C, H, W = x.shape
    hid = w1.shape[0]
    HW = H * W
    itemsize = jnp.dtype(x.dtype).itemsize
    x_flat = x.reshape(B, C, HW)

    # Spatial tile: multiple of 128 lanes (or the full HW when HW < 128).
    # ~8 MiB per (1, C, t_hw) buffer amortizes the ~0.35 us per-grid-step
    # overhead on every TPU generation while keeping 2 pipeline buffers +
    # accumulators + weights far below v7x's 64 MiB physical VMEM.
    if t_hw is None:
        target_bytes = 8 * 1024 * 1024
        t_hw = (target_bytes // max(1, C * itemsize)) // 128 * 128
        t_hw = max(128, t_hw)
    if HW < 128:
        t_hw = HW                                    # full-dim block is always legal
    else:
        t_hw = max(128, (min(t_hw, HW) // 128) * 128)
    lane = min(t_hw, 128)
    num_tiles = pl.cdiv(HW, t_hw)
    # TODO(synk): for extremely large C (C*128*itemsize >> 8 MiB) the minimum
    # legal tile already dominates VMEM; a C-tiled grid (with a cross-block
    # reduction for the channel-mixing fc) would be needed in that regime.

    kernel = _make_kernel(C, HW, t_hw, lane, num_tiles)

    # VMEM budget: double-buffered x tile + both accumulators + weights + out.
    tile_bytes = C * t_hw * itemsize
    acc_bytes = C * lane * (4 + itemsize)
    w_bytes = 4 * C * hid * 4
    needed = 2 * tile_bytes + acc_bytes + w_bytes + 2 * C * itemsize
    vmem_limit = int(min(max(2 * needed, 32 * 1024 * 1024), 64 * 1024 * 1024))

    cost = pl.CostEstimate(
        flops=2 * B * C * HW + 8 * B * C * hid,
        transcendentals=B * C,                         # one sigmoid per output element
        bytes_accessed=B * C * HW * itemsize + 2 * C * hid * 4 + B * C * itemsize,
    )

    out = pl.pallas_call(
        kernel,
        out_shape=jax.ShapeDtypeStruct((B, 1, C), x.dtype),
        grid_spec=pltpu.PrefetchScalarGridSpec(
            num_scalar_prefetch=0,
            grid=(B, num_tiles),                       # (parallel batch, spatial reduction)
            in_specs=[
                pl.BlockSpec((1, C, t_hw), lambda b, k: (b, 0, k)),
                pl.BlockSpec((C, hid), lambda b, k: (0, 0)),   # weights stay VMEM-resident
                pl.BlockSpec((hid, C), lambda b, k: (0, 0)),
            ],
            out_specs=pl.BlockSpec((1, 1, C), lambda b, k: (b, 0, 0)),
            scratch_shapes=[
                pltpu.VMEM((1, C, lane), jnp.float32),  # running sum partials (f32)
                pltpu.VMEM((1, C, lane), x.dtype),      # running max partials (exact in x dtype)
            ],
        ),
        compiler_params=pltpu.CompilerParams(
            dimension_semantics=("parallel", "arbitrary"),
            vmem_limit_bytes=vmem_limit,
        ),
        cost_estimate=cost,
    )(x_flat, jnp.transpose(w1), jnp.transpose(w2))

    return out.reshape(B, C, 1, 1)


def channel_attention_ref(x, w1, w2):
    """Pure-JAX reference mirroring the PyTorch module."""
    xf = x.astype(jnp.float32)
    avg = jnp.mean(xf, axis=(2, 3))          # (B, C)
    mx = jnp.max(xf, axis=(2, 3))            # (B, C)

    def fc(v):
        h = v @ w1.T                          # (B, hid)
        h = jnp.where(h > 0, h, 0.2 * h)
        return h @ w2.T                       # (B, C)

    out = jax.nn.sigmoid(fc(avg) + fc(mx))
    return out[:, :, None, None]


if __name__ == "__main__":
    key = jax.random.PRNGKey(0)
    k_x, k_w1, k_w2, k_x2, k_x3 = jax.random.split(key, 5)

    B, C, H, W = 2, 32, 16, 16               # in_planes=32 -> hidden = 32 // 16 = 2
    hid = C // 16

    x = jax.random.normal(k_x, (B, C, H, W), dtype=jnp.float32)
    # Conv2d 1x1 weights (bias=False), squeezed to 2-D:
    w1 = 0.1 * jax.random.normal(k_w1, (hid, C), dtype=jnp.float32)   # (C//16, C, 1, 1)
    w2 = 0.1 * jax.random.normal(k_w2, (C, hid), dtype=jnp.float32)   # (C, C//16, 1, 1)

    # 1) Multi-tile reduction path (HW=256 -> two 128-wide spatial tiles).
    out = jax.block_until_ready(channel_attention(x, w1, w2, t_hw=128))
    ref = channel_attention_ref(x, w1, w2)
    assert out.shape == (B, C, 1, 1)
    assert jnp.allclose(out, ref, atol=1e-5, rtol=1e-5), "mismatch (multi-tile)"

    # 2) Auto tile-size path (single tile, static-unroll chunk loop).
    out_auto = jax.block_until_ready(channel_attention(x, w1, w2))
    assert jnp.allclose(out_auto, ref, atol=1e-5, rtol=1e-5), "mismatch (auto tile)"

    # 3) Ragged last tile (HW=144 -> 128 + 16 valid lanes, masked sum/max).
    x2 = jax.random.normal(k_x2, (B, C, 12, 12), dtype=jnp.float32)
    out2 = jax.block_until_ready(channel_attention(x2, w1, w2, t_hw=128))
    ref2 = channel_attention_ref(x2, w1, w2)
    assert jnp.allclose(out2, ref2, atol=1e-5, rtol=1e-5), "mismatch (ragged tile)"

    # 4) Larger ragged spatial extent (HW=2209 -> fori_loop chunk path + masked tail).
    x3 = jax.random.normal(k_x3, (B, C, 47, 47), dtype=jnp.float32)
    out3 = jax.block_until_ready(channel_attention(x3, w1, w2))
    ref3 = channel_attention_ref(x3, w1, w2)
    assert jnp.allclose(out3, ref3, atol=1e-5, rtol=1e-5), "mismatch (fori_loop path)"

    # 5) bf16 input (memory-bound fast path); f32 sum / bf16 max accumulation.
    x_bf = x.astype(jnp.bfloat16)
    out_bf = jax.block_until_ready(channel_attention(x_bf, w1, w2, t_hw=128))
    ref_bf = channel_attention_ref(x_bf, w1, w2)
    assert jnp.allclose(out_bf.astype(jnp.float32), ref_bf, atol=2e-2, rtol=2e-2), \
        "mismatch (bf16)"

    print("KERNEL_OK")
</pallas_src>

<mosaic_0001>
module attributes {stable_mosaic.version = 11 : i64} {
  func.func @kernel(%arg0: i32, %arg1: i32, %arg2: memref<1x32x128xf32, #tpu.memory_space<vmem>>, %arg3: memref<32x2xf32, #tpu.memory_space<vmem>>, %arg4: memref<2x32xf32, #tpu.memory_space<vmem>>, %arg5: memref<1x1x32xf32, #tpu.memory_space<vmem>>, %arg6: memref<1x32x128xf32, #tpu.memory_space<vmem>>, %arg7: memref<1x32x128xf32, #tpu.memory_space<vmem>>) attributes {dimension_semantics = [#tpu.dimension_semantics<parallel>, #tpu.dimension_semantics<arbitrary>], iteration_bounds = array<i64: 2, 2>, scalar_prefetch = 0 : i64, scratch_operands = 2 : i64, tpu.core_type = #tpu.core_type<tc>, window_params = [{transform_indices = @transform_0, window_bounds = array<i64: 1, 32, 128>}, {pipeline_mode = #tpu.pipeline_mode<synchronous>, transform_indices = @transform_1, window_bounds = array<i64: 32, 2>}, {pipeline_mode = #tpu.pipeline_mode<synchronous>, transform_indices = @transform_2, window_bounds = array<i64: 2, 32>}, {transform_indices = @transform_3, window_bounds = array<i64: 1, 1, 32>}]} {
    %c0_i32 = arith.constant 0 : i32
    %0 = arith.cmpi eq, %arg1, %c0_i32 : i32
    %1 = arith.extui %0 : i1 to i32
    %c0_i32_0 = arith.constant 0 : i32
    %2 = arith.cmpi ne, %1, %c0_i32_0 : i32
    scf.if %2 {
      %cst = arith.constant 0.000000e+00 : f32
      %13 = vector.broadcast %cst : f32 to vector<1x32x128xf32>
      %c0_16 = arith.constant 0 : index
      %c0_17 = arith.constant 0 : index
      %c0_18 = arith.constant 0 : index
      %14 = vector.load %arg6[%c0_16, %c0_17, %c0_18] : memref<1x32x128xf32, #tpu.memory_space<vmem>>, vector<1x32x128xf32>
      tpu.vector_store %arg6[%c0_16, %c0_17, %c0_18], %13 {strides = array<i32>} : memref<1x32x128xf32, #tpu.memory_space<vmem>>, vector<1x32x128xf32>,
      %cst_19 = arith.constant 0xFF800000 : f32
      %15 = vector.broadcast %cst_19 : f32 to vector<1x32x128xf32>
      %c0_20 = arith.constant 0 : index
      %c0_21 = arith.constant 0 : index
      %c0_22 = arith.constant 0 : index
      %16 = vector.load %arg7[%c0_20, %c0_21, %c0_22] : memref<1x32x128xf32, #tpu.memory_space<vmem>>, vector<1x32x128xf32>
      tpu.vector_store %arg7[%c0_20, %c0_21, %c0_22], %15 {strides = array<i32>} : memref<1x32x128xf32, #tpu.memory_space<vmem>>, vector<1x32x128xf32>,
    } else {
    }
    %c0 = arith.constant 0 : index
    %c0_1 = arith.constant 0 : index
    %c0_2 = arith.constant 0 : index
    %3 = vector.load %arg6[%c0, %c0_1, %c0_2] : memref<1x32x128xf32, #tpu.memory_space<vmem>>, vector<1x32x128xf32>
    %c0_3 = arith.constant 0 : index
    %c0_4 = arith.constant 0 : index
    %c0_5 = arith.constant 0 : index
    %4 = vector.load %arg7[%c0_3, %c0_4, %c0_5] : memref<1x32x128xf32, #tpu.memory_space<vmem>>, vector<1x32x128xf32>
    %c0_6 = arith.constant 0 : index
    %c0_7 = arith.constant 0 : index
    %c0_8 = arith.constant 0 : index
    %5 = vector.load %arg2[%c0_6, %c0_7, %c0_8] : memref<1x32x128xf32, #tpu.memory_space<vmem>>, vector<1x32x128xf32>
    %6 = arith.addf %3, %5 : vector<1x32x128xf32>
    %7 = arith.maximumf %4, %5 : vector<1x32x128xf32>
    %c0_9 = arith.constant 0 : index
    %c0_10 = arith.constant 0 : index
    %c0_11 = arith.constant 0 : index
    %8 = vector.load %arg6[%c0_9, %c0_10, %c0_11] : memref<1x32x128xf32, #tpu.memory_space<vmem>>, vector<1x32x128xf32>
    tpu.vector_store %arg6[%c0_9, %c0_10, %c0_11], %6 {strides = array<i32>} : memref<1x32x128xf32, #tpu.memory_space<vmem>>, vector<1x32x128xf32>,
    %c0_12 = arith.constant 0 : index
    %c0_13 = arith.constant 0 : index
    %c0_14 = arith.constant 0 : index
    %9 = vector.load %arg7[%c0_12, %c0_13, %c0_14] : memref<1x32x128xf32, #tpu.memory_space<vmem>>, vector<1x32x128xf32>
    tpu.vector_store %arg7[%c0_12, %c0_13, %c0_14], %7 {strides = array<i32>} : memref<1x32x128xf32, #tpu.memory_space<vmem>>, vector<1x32x128xf32>,
    %c1_i32 = arith.constant 1 : i32
    %10 = arith.cmpi eq, %arg1, %c1_i32 : i32
    %11 = arith.extui %10 : i1 to i32
    %c0_i32_15 = arith.constant 0 : i32
    %12 = arith.cmpi ne, %11, %c0_i32_15 : i32
    scf.if %12 {
      %c0_16 = arith.constant 0 : index
      %c0_17 = arith.constant 0 : index
      %c0_18 = arith.constant 0 : index
      %13 = vector.load %arg6[%c0_16, %c0_17, %c0_18] : memref<1x32x128xf32, #tpu.memory_space<vmem>>, vector<1x32x128xf32>
      %cst = arith.constant dense<0.000000e+00> : vector<1x32xf32>
      %14 = vector.multi_reduction <add>, %13, %cst [2] : vector<1x32x128xf32> to vector<1x32xf32>
      %cst_19 = arith.constant 3.906250e-03 : f32
      %15 = vector.broadcast %cst_19 : f32 to vector<1x32xf32>
      %16 = arith.mulf %14, %15 : vector<1x32xf32>
      %c0_20 = arith.constant 0 : index
      %c0_21 = arith.constant 0 : index
      %c0_22 = arith.constant 0 : index
      %17 = vector.load %arg7[%c0_20, %c0_21, %c0_22] : memref<1x32x128xf32, #tpu.memory_space<vmem>>, vector<1x32x128xf32>
      %cst_23 = arith.constant dense<0xFF800000> : vector<1x32xf32>
      %18 = vector.multi_reduction <maximumf>, %17, %cst_23 [2] : vector<1x32x128xf32> to vector<1x32xf32>
      %19 = tpu.concatenate %16, %18 in 0 : vector<1x32xf32>, vector<1x32xf32> -> vector<2x32xf32>
      %c0_24 = arith.constant 0 : index
      %c0_25 = arith.constant 0 : index
      %20 = vector.load %arg3[%c0_24, %c0_25] : memref<32x2xf32, #tpu.memory_space<vmem>>, vector<32x2xf32>
      %c0_26 = arith.constant 0 : index
      %c0_27 = arith.constant 0 : index
      %21 = vector.load %arg4[%c0_26, %c0_27] : memref<2x32xf32, #tpu.memory_space<vmem>>, vector<2x32xf32>
      %cst_28 = arith.constant dense<0.000000e+00> : vector<2x2xf32>
      %22 = tpu.matmul %19, %20, %cst_28 {dimension_numbers = #tpu.dot_dimension_numbers<[1], [0], [0], [1], [0, 0, 1, 1], [], []>} : vector<2x32xf32>, vector<32x2xf32>, vector<2x2xf32> -> vector<2x2xf32>
      %cst_29 = arith.constant 0.000000e+00 : f32
      %23 = vector.broadcast %cst_29 : f32 to vector<2x2xf32>
      %24 = arith.cmpf ogt, %22, %23 : vector<2x2xf32>
      %cst_30 = arith.constant 2.000000e-01 : f32
      %25 = vector.broadcast %cst_30 : f32 to vector<2x2xf32>
      %26 = arith.mulf %25, %22 : vector<2x2xf32>
      %27 = arith.select %24, %22, %26 : vector<2x2xi1>, vector<2x2xf32>
      %cst_31 = arith.constant dense<0.000000e+00> : vector<2x32xf32>
      %28 = tpu.matmul %27, %21, %cst_31 {dimension_numbers = #tpu.dot_dimension_numbers<[1], [0], [0], [1], [0, 0, 1, 1], [], []>} : vector<2x2xf32>, vector<2x32xf32>, vector<2x32xf32> -> vector<2x32xf32>
      %29 = vector.extract_strided_slice %28 {offsets = [0, 0], sizes = [1, 32], strides = [1, 1]} : vector<2x32xf32> to vector<1x32xf32>
      %30 = vector.extract_strided_slice %28 {offsets = [1, 0], sizes = [1, 32], strides = [1, 1]} : vector<2x32xf32> to vector<1x32xf32>
      %31 = arith.addf %29, %30 : vector<1x32xf32>
      %32 = arith.negf %31 : vector<1x32xf32>
      %33 = math.exp %32 : vector<1x32xf32>
      %cst_32 = arith.constant 1.000000e+00 : f32
      %34 = vector.broadcast %cst_32 : f32 to vector<1x32xf32>
      %35 = arith.addf %34, %33 : vector<1x32xf32>
      %36 = arith.divf %34, %35 : vector<1x32xf32>
      %c0_33 = arith.constant 0 : index
      %c0_34 = arith.constant 0 : index
      %c0_35 = arith.constant 0 : index
      %37 = vector.load %arg5[%c0_33, %c0_34, %c0_35] : memref<1x1x32xf32, #tpu.memory_space<vmem>>, vector<1x1x32xf32>
      %38 = vector.shape_cast %37 : vector<1x1x32xf32> to vector<1x32xf32>
      %39 = vector.shape_cast %36 : vector<1x32xf32> to vector<1x1x32xf32>
      tpu.vector_store %arg5[%c0_33, %c0_34, %c0_35], %39 {strides = array<i32>} : memref<1x1x32xf32, #tpu.memory_space<vmem>>, vector<1x1x32xf32>,
    } else {
    }
    return
  }
  func.func @transform_0(%arg0: i32, %arg1: i32) -> (i32, i32, i32) {
    %c0_i32 = arith.constant 0 : i32
    %c0_i32_0 = arith.constant 0 : i32
    return %arg0, %c0_i32, %arg1 : i32, i32, i32
  }
  func.func @transform_1(%arg0: i32, %arg1: i32) -> (i32, i32) {
    %c0_i32 = arith.constant 0 : i32
    %c0_i32_0 = arith.constant 0 : i32
    %c0_i32_1 = arith.constant 0 : i32
    return %c0_i32, %c0_i32_0 : i32, i32
  }
  func.func @transform_2(%arg0: i32, %arg1: i32) -> (i32, i32) {
    %c0_i32 = arith.constant 0 : i32
    %c0_i32_0 = arith.constant 0 : i32
    %c0_i32_1 = arith.constant 0 : i32
    return %c0_i32, %c0_i32_0 : i32, i32
  }
  func.func @transform_3(%arg0: i32, %arg1: i32) -> (i32, i32, i32) {
    %c0_i32 = arith.constant 0 : i32
    %c0_i32_0 = arith.constant 0 : i32
    %c0_i32_1 = arith.constant 0 : i32
    return %arg0, %c0_i32, %c0_i32_0 : i32, i32, i32
  }
}

</mosaic_0001>

<llo_original>
// kernel: tpu_custom_call.1
$region0: #{tpu_custom_call.1}
  #allocation0 [shape = 'u32[]', space=smem, size = 0x4, offset = 0x4, fixed_abs, tag = 'smem constant byte address 0x4 - core index']
  #allocation1 [shape = 'u32[72,128]{1,0:T(1,128)}', space=vmem, size = 0x9000, scoped, tag = 'internal scratch']
  #allocation2 [shape = 'f32[1,32,128]{2,1,0:T(8,128)}', space=vmem, size = 0x4000, scoped, tag = 'scratch operand']
  #allocation3 [shape = 'f32[1,32,128]{2,1,0:T(8,128)}', space=vmem, size = 0x4000, scoped, tag = 'scratch operand']
  %s0 = inlined_call_operand.hbm [shape: f32[2,32,256], index: 0, kind: input, shape index: {}]
  %s1 = inlined_call_operand.vmem [shape: f32[32,2], index: 1, kind: input, shape index: {}]
  %s2 = inlined_call_operand.vmem [shape: f32[2,32], index: 2, kind: input, shape index: {}]
  %s3 = inlined_call_operand.hbm [shape: f32[2,1,32], index: 3, kind: output, shape index: {}]
  %s4 = sld [smem:[#allocation0]]
  $region57: #{tpu_custom_call.1} parent=0
    _
  %s6 = ssub.s32 1, %s4
  %s7 = scalar_select 0, %s6, %s4
  $region1: #{tpu_custom_call.1} parent=0
    #allocation4 [shape = 'u8[32768]{0}', space=vmem, size = 0x8000, scoped, tag = 'input window, operand 0']
    #allocation5 [shape = 's32[2]{0}', space=sflag, size = 0x8, scoped, tag = 'scoped memory for tpu_custom_call.1']
    #allocation6 [shape = 's32[2]{0}', space=sflag, size = 0x8, scoped, tag = 'scoped memory for tpu_custom_call.1']
    #allocation7 [shape = 'u8[1024]{0}', space=vmem, size = 0x400, scoped, tag = 'output window, operand 0']
    %8 = vsyncpa [#allocation5], 0
    %s9 = scalar_lea.sflag [#allocation5], 1
    %10 = vsyncpa %s9, 0
    %11 = vsyncpa [#allocation6], 0
    %s12 = scalar_lea.sflag [#allocation6], 1
    %13 = vsyncpa %s12, 0
    loop: start=0, step=1, limit=6
    $region2: #{tpu_custom_call.1} parent=1 // loop_pre_header
      _
    $region3: #{tpu_custom_call.1} parent=1 // loop_header
      %s15 = sphi 0, %s19
      %p16 = scmp.ge.s32.totalorder %s15, 6
      %s22 = sphi 0, %s34
      %s23 = sphi 0, %s30
      %s24 = sphi 0, %s22
      %s25 = sphi 0, %s23
      %s26 = sphi 0, %s24
      %s27 = sphi 0, %s25
      %s39 = sphi 0, %s41
      %s42 = sphi 0, %s39
      %s43 = sphi 0, %s42
      %s59 = sphi 0, %s43
      %s63 = sphi 0, %s63
      %s65 = sphi 0, %s63
      %s66 = sphi 0, %s65
      %s80 = sphi 0, %s66
      %s84 = sphi 0, %s84
      %s86 = sphi 0, %s84
      %s87 = sphi 0, %s86
      %s101 = sphi 0, %s87
      %s107 = sphi 0, %s109
      %s110 = sphi 0, %s107
      %s111 = sphi 0, %s110
      %s127 = sphi 0, %s111
    $region4: #{tpu_custom_call.1} parent=1 // loop_header_branch
      %18 = sbr.rel (%p16) target = $region8
    $region5: #{tpu_custom_call.1} parent=1 // loop_body
      %s20 = ssub.s32 %s15, 1
      %s21 = ssub.s32 %s15, 2
      %s28 = sadd.s32 1, %s23
      %p29 = scmp.ge.s32.totalorder %s28, 2
      %s30 = scalar_select %p29, 0, %s28
      %s31 = sadd.s32 1, %s22
      %s32 = scalar_select %p29, %s31, %s22
      %p33 = scmp.ge.s32.totalorder %s32, 2
      %s34 = scalar_select %p33, 0, %s32
      %s35 = ssub.s32 %s22, %s34
      %s36 = ssub.s32 %s23, %s30
      %s37 = sor.u32 %s35, %s36
      %p38 = scmp.eq.s32.totalorder %s37, 0
      %s40 = sadd.s32 %s39, 1
      %s41 = scalar_select %p38, %s39, %s40
      %p44 = pneg %p38
      %p45 = scmp.eq.s32.totalorder %s15, 3
      %p46 = por %p44, %p45
      %p47 = scmp.ne.s32.totalorder %s39, %s42
      %p48 = scmp.eq.s32.totalorder %s15, 0
      %p49 = por %p47, %p48
      %p50 = scmp.ne.s32.totalorder %s39, %s42
      %p51 = scmp.eq.s32.totalorder %s20, 3
      %p52 = por %p50, %p51
      %p53 = scmp.ne.s32.totalorder %s42, %s43
      %p54 = scmp.eq.s32.totalorder %s20, 0
      %p55 = por %p53, %p54
      %p56 = scmp.ne.s32.totalorder %s42, %s43
      %p57 = scmp.eq.s32.totalorder %s21, 3
      %p58 = por %p56, %p57
      %p60 = scmp.ne.s32.totalorder %s43, %s59
      %p61 = scmp.eq.s32.totalorder %s21, 0
      %p62 = por %p60, %p61
      %s64 = sadd.s32 %s63, 1
      %p67 = scmp.eq.s32.totalorder %s15, 3
      %p68 = scmp.ne.s32.totalorder %s63, %s65
      %p69 = scmp.eq.s32.totalorder %s15, 0
      %p70 = por %p68, %p69
      %p71 = scmp.ne.s32.totalorder %s63, %s65
      %p72 = scmp.eq.s32.totalorder %s20, 3
      %p73 = por %p71, %p72
      %p74 = scmp.ne.s32.totalorder %s65, %s66
      %p75 = scmp.eq.s32.totalorder %s20, 0
      %p76 = por %p74, %p75
      %p77 = scmp.ne.s32.totalorder %s65, %s66
      %p78 = scmp.eq.s32.totalorder %s21, 3
      %p79 = por %p77, %p78
      %p81 = scmp.ne.s32.totalorder %s66, %s80
      %p82 = scmp.eq.s32.totalorder %s21, 0
      %p83 = por %p81, %p82
      %s85 = sadd.s32 %s84, 1
      %p88 = scmp.eq.s32.totalorder %s15, 3
      %p89 = scmp.ne.s32.totalorder %s84, %s86
      %p90 = scmp.eq.s32.totalorder %s15, 0
      %p91 = por %p89, %p90
      %p92 = scmp.ne.s32.totalorder %s84, %s86
      %p93 = scmp.eq.s32.totalorder %s20, 3
      %p94 = por %p92, %p93
      %p95 = scmp.ne.s32.totalorder %s86, %s87
      %p96 = scmp.eq.s32.totalorder %s20, 0
      %p97 = por %p95, %p96
      %p98 = scmp.ne.s32.totalorder %s86, %s87
      %p99 = scmp.eq.s32.totalorder %s21, 3
      %p100 = por %p98, %p99
      %p102 = scmp.ne.s32.totalorder %s87, %s101
      %p103 = scmp.eq.s32.totalorder %s21, 0
      %p104 = por %p102, %p103
      %s105 = ssub.s32 %s22, %s34
      %p106 = scmp.eq.s32.totalorder %s105, 0
      %s108 = sadd.s32 %s107, 1
      %s109 = scalar_select %p106, %s107, %s108
      %p112 = pneg %p106
      %p113 = scmp.eq.s32.totalorder %s15, 3
      %p114 = por %p112, %p113
      %p115 = scmp.ne.s32.totalorder %s107, %s110
      %p116 = scmp.eq.s32.totalorder %s15, 0
      %p117 = por %p115, %p116
      %p118 = scmp.ne.s32.totalorder %s107, %s110
      %p119 = scmp.eq.s32.totalorder %s20, 3
      %p120 = por %p118, %p119
      %p121 = scmp.ne.s32.totalorder %s110, %s111
      %p122 = scmp.eq.s32.totalorder %s20, 0
      %p123 = por %p121, %p122
      %p124 = scmp.ne.s32.totalorder %s110, %s111
      %p125 = scmp.eq.s32.totalorder %s21, 3
      %p126 = por %p124, %p125
      %p128 = scmp.ne.s32.totalorder %s111, %s127
      %p129 = scmp.eq.s32.totalorder %s21, 0
      %p130 = por %p128, %p129
      %p131 = scmp.le.s32.totalorder 1, %s15
      %p132 = scmp.lt.s32.totalorder %s15, 5
      %p133 = pnand %p131, %p132
      %p134 = pneg %p133
      // Predicated region
      $region9: #{tpu_custom_call.1} parent=5 // pred_check
        _
      $region10: #{tpu_custom_call.1} parent=5 // pred_check_branch
        %136 = sbr.rel (%p133) target = $region12
      $region11: #{tpu_custom_call.1} parent=5 // pred_region
        %s137 = ssub.s32 %s15, 1
        // Predicated region
        $region13: #{tpu_custom_call.1} parent=11 // pred_check
          %p138 = pneg %p76
        $region14: #{tpu_custom_call.1} parent=11 // pred_check_branch
          %140 = sbr.rel (%p138) target = $region16
        $region15: #{tpu_custom_call.1} parent=11 // pred_region
          _
        $region16: #{tpu_custom_call.1} parent=11 // pred_fallthru
          _
        // Predicated region
        $region17: #{tpu_custom_call.1} parent=11 // pred_check
          %p141 = pneg %p97
        $region18: #{tpu_custom_call.1} parent=11 // pred_check_branch
          %143 = sbr.rel (%p141) target = $region20
        $region19: #{tpu_custom_call.1} parent=11 // pred_region
          _
        $region20: #{tpu_custom_call.1} parent=11 // pred_fallthru
          _
      $region12: #{tpu_custom_call.1} parent=5 // pred_fallthru
        _
      %p144 = scmp.lt.s32.totalorder %s15, 4
      // Predicated region
      $region21: #{tpu_custom_call.1} parent=5 // pred_check
        %p145 = pneg %p144
      $region22: #{tpu_custom_call.1} parent=5 // pred_check_branch
        %147 = sbr.rel (%p145) target = $region24
      $region23: #{tpu_custom_call.1} parent=5 // pred_region
        // Predicated region
        $region25: #{tpu_custom_call.1} parent=23 // pred_check
          %p148 = pneg %p49
        $region26: #{tpu_custom_call.1} parent=23 // pred_check_branch
          %150 = sbr.rel (%p148) target = $region28
        $region27: #{tpu_custom_call.1} parent=23 // pred_region
          %s151 = sand.u32 %s39, 1
          %s152 = scalar_lea.sflag [#allocation5], %s151
          %s153 = sand.u32 %s39, 1
          %s154 = smul.addr %s153, 32
          %s155 = scalar_lea.vmem [#allocation4], %s154
          %157 = vsyncadd %s152, 0
          %s158 = smul.addr %s22, 8
          %s159 = sadd.s32 %s23, %s158
          %s160 = smul.addr %s159, 8
          %s161 = scalar_lea.hbm %s0, %s160
          %s162 = sshll.u32 %s161, 4
          %s163 = int_to_ptr.hbm [resolvable:$true] %s162
          %s164 = sshll.u32 %s155, 4
          %s165 = int_to_ptr.vmem [resolvable:$true] %s164
          %170 = dma.hbm_to_vmem [thread:$0]  %s163, 512, %s165, %s152, 256, 128, 8
        $region28: #{tpu_custom_call.1} parent=23 // pred_fallthru
          _
      $region24: #{tpu_custom_call.1} parent=5 // pred_fallthru
        _
      %p171 = scmp.le.s32.totalorder 1, %s15
      %p172 = scmp.lt.s32.totalorder %s15, 5
      %p173 = pnand %p171, %p172
      %p174 = pneg %p173
      // Predicated region
      $region29: #{tpu_custom_call.1} parent=5 // pred_check
        _
      $region30: #{tpu_custom_call.1} parent=5 // pred_check_branch
        %176 = sbr.rel (%p173) target = $region32
      $region31: #{tpu_custom_call.1} parent=5 // pred_region
        %s177 = ssub.s32 %s15, 1
        %s178 = sand.u32 %s42, 1
        %s179 = scalar_lea.sflag [#allocation5], %s178
        %s180 = sand.u32 %s42, 1
        %s181 = smul.addr %s180, 32
        %s182 = scalar_lea.vmem [#allocation4], %s181
        // Predicated region
        $region33: #{tpu_custom_call.1} parent=31 // pred_check
          %p183 = pneg %p55
        $region34: #{tpu_custom_call.1} parent=31 // pred_check_branch
          %185 = sbr.rel (%p183) target = $region36
        $region35: #{tpu_custom_call.1} parent=31 // pred_region
          %187 = dma.done %s179, 512
        $region36: #{tpu_custom_call.1} parent=31 // pred_fallthru
          _
        %s188 = sand.u32 %s42, 1
        %s189 = scalar_lea.sflag [#allocation5], %s188
        %s190 = sand.u32 %s42, 1
        %s191 = smul.addr %s190, 32
        %s192 = scalar_lea.vmem [#allocation4], %s191
        %p193 = pneg %p55
        %p194 = pneg %p52
        %p195 = pneg %p76
        %p196 = pneg %p73
        %p197 = pneg %p97
        %p198 = pneg %p94
        %p199 = pneg %p123
        %p200 = pneg %p120
        %s201 = sand.u32 %s110, 1
        %s202 = scalar_lea.sflag [#allocation6], %s201
        %s203 = sand.u32 %s110, 1
        %s204 = scalar_lea.vmem [#allocation7], %s203
        %p205 = scmp.eq.s32.totalorder %s25, 0
        // Predicated region
        $region37: #{tpu_custom_call.1} parent=31 // pred_check
          %p206 = pneg %p205
        $region38: #{tpu_custom_call.1} parent=31 // pred_check_branch
          %208 = sbr.rel (%p206) target = $region40
        $region39: #{tpu_custom_call.1} parent=31 // pred_region
          %209 = vst [vmem:[#allocation2] sm:$0xff] 0.0
          %210 = vst [vmem:[#allocation2 + $0x8] sm:$0xff] 0.0
          %211 = vst [vmem:[#allocation2 + $0x10] sm:$0xff] 0.0
          %212 = vst [vmem:[#allocation2 + $0x18] sm:$0xff] 0.0
          %213 = vst [vmem:[#allocation3] sm:$0xff] -inf
          %214 = vst [vmem:[#allocation3 + $0x8] sm:$0xff] -inf
          %215 = vst [vmem:[#allocation3 + $0x10] sm:$0xff] -inf
          %216 = vst [vmem:[#allocation3 + $0x18] sm:$0xff] -inf
        $region40: #{tpu_custom_call.1} parent=31 // pred_fallthru
          _
        %v217 = vld [vmem:[#allocation2] sm:$0xff]
        %v218 = vld [vmem:[#allocation2 + $0x8] sm:$0xff]
        %v219 = vld [vmem:[#allocation2 + $0x10] sm:$0xff]
        %v220 = vld [vmem:[#allocation2 + $0x18] sm:$0xff]
        %v221 = vld [vmem:[#allocation3] sm:$0xff]
        %v222 = vld [vmem:[#allocation3 + $0x8] sm:$0xff]
        %v223 = vld [vmem:[#allocation3 + $0x10] sm:$0xff]
        %v224 = vld [vmem:[#allocation3 + $0x18] sm:$0xff]
        %v225 = vld [vmem:[%s182] sm:$0xff]
        %v226 = vld [vmem:[%s182 + $0x8] sm:$0xff]
        %v227 = vld [vmem:[%s182 + $0x10] sm:$0xff]
        %v228 = vld [vmem:[%s182 + $0x18] sm:$0xff]
        %v229 = vadd.f32 %v217, %v225
        %v230 = vadd.f32 %v218, %v226
        %v231 = vadd.f32 %v219, %v227
        %v232 = vadd.f32 %v220, %v228
        %v233 = vmax.f32 %v221, %v225
        %v234 = vmax.f32 %v222, %v226
        %v235 = vmax.f32 %v223, %v227
        %v236 = vmax.f32 %v224, %v228
        %237 = vst [vmem:[#allocation2] sm:$0xff] %v229
        %238 = vst [vmem:[#allocation2 + $0x8] sm:$0xff] %v230
        %239 = vst [vmem:[#allocation2 + $0x10] sm:$0xff] %v231
        %240 = vst [vmem:[#allocation2 + $0x18] sm:$0xff] %v232
        %241 = vst [vmem:[#allocation3] sm:$0xff] %v233
        %242 = vst [vmem:[#allocation3 + $0x8] sm:$0xff] %v234
        %243 = vst [vmem:[#allocation3 + $0x10] sm:$0xff] %v235
        %244 = vst [vmem:[#allocation3 + $0x18] sm:$0xff] %v236
        %p245 = scmp.eq.s32.totalorder %s25, 1
        // Predicated region
        $region41: #{tpu_custom_call.1} parent=31 // pred_check
          %p246 = pneg %p245
        $region42: #{tpu_custom_call.1} parent=31 // pred_check_branch
          %248 = sbr.rel (%p246) target = $region44
        $region43: #{tpu_custom_call.1} parent=31 // pred_region
          %v249 = vld [vmem:[#allocation2] sm:$0xff]
          %v250 = vld [vmem:[#allocation2 + $0x8] sm:$0xff]
          %v251 = vld [vmem:[#allocation2 + $0x10] sm:$0xff]
          %v252 = vld [vmem:[#allocation2 + $0x18] sm:$0xff]
          %253 = vadd.xlane.f32.xlu0 %v249
          %v254 = vpop.xlane.xlu0 %253
          %255 = vadd.xlane.f32.xlu0 %v250
          %v256 = vpop.xlane.xlu0 %255
          %257 = vadd.xlane.f32.xlu0 %v251
          %v258 = vpop.xlane.xlu0 %257
          %259 = vadd.xlane.f32.xlu0 %v252
          %v260 = vpop.xlane.xlu0 %259
          %v261 = vmul.f32 %v254, 0.00390625
          %v262 = vmul.f32 %v256, 0.00390625
          %v263 = vmul.f32 %v258, 0.00390625
          %v264 = vmul.f32 %v260, 0.00390625
          %v265 = vld [vmem:[#allocation3] sm:$0xff]
          %v266 = vld [vmem:[#allocation3 + $0x8] sm:$0xff]
          %v267 = vld [vmem:[#allocation3 + $0x10] sm:$0xff]
          %v268 = vld [vmem:[#allocation3 + $0x18] sm:$0xff]
          %269 = vmax.xlane.f32.xlu0 %v265
          %v270 = vpop.xlane.xlu0 %269
          %271 = vmax.xlane.f32.xlu0 %v266
          %v272 = vpop.xlane.xlu0 %271
          %273 = vmax.xlane.f32.xlu0 %v267
          %v274 = vpop.xlane.xlu0 %273
          %275 = vmax.xlane.f32.xlu0 %v268
          %v276 = vpop.xlane.xlu0 %275
          %v281 = vlaneseq
          %v282 = vand.u32 %v281, 127
          %v283 = vperm.slane %v261, %v282
          %v284 = vadd.s32 %v282, 4294967288
          %v285 = vperm.slane %v262, %v284
          %vm286 = vcmask 130112
          %v287 = vsel %vm286, %v285, %v283
          %v288 = vadd.s32 %v282, 4294967280
          %v289 = vperm.slane %v263, %v288
          %vm290 = vcmask 195712
          %v291 = vsel %vm290, %v289, %v287
          %v292 = vadd.s32 %v282, 4294967272
          %v293 = vperm.slane %v264, %v292
          %vm294 = vcmask 261312
          %v295 = vsel %vm294, %v293, %v291
          %v301 = vperm.slane %v270, %v282
          %v302 = vperm.slane %v272, %v284
          %v303 = vsel %vm286, %v302, %v301
          %v304 = vperm.slane %v274, %v288
          %v305 = vsel %vm290, %v304, %v303
          %v306 = vperm.slane %v276, %v292
          %v307 = vsel %vm294, %v306, %v305
          %vm309 = vcmask 1040384
          %v310 = vsel %vm309, %v295, %v307
          %v311 = vld [vmem:[%s1] sm:$0xff]
          %v312 = vld [vmem:[%s1 + $0x8] sm:$0xff]
          %v313 = vld [vmem:[%s1 + $0x10] sm:$0xff]
          %v314 = vld [vmem:[%s1 + $0x18] sm:$0xff]
          %v315 = vld [vmem:[%s2] sm:$0x3]
          %vm316 = vcmask 261120
          %v318 = vsel %vm316, %v310, 0
          %320 = vmatpush.msra.mxu0 0.0
          %321 = vmatpush.msra.mxu0 0.0
          %322 = vmatpush.msra.mxu0 0.0
          %323 = vmatpush.msra.mxu0 0.0
          %324 = vmatpush.msra.mxu0 0.0
          %325 = vmatpush.msra.mxu0 0.0
          %326 = vmatpush.msra.mxu0 0.0
          %327 = vmatpush.msra.mxu0 0.0
          %328 = vmatpush.msra.mxu0 0.0
          %329 = vmatpush.msra.mxu0 0.0
          %330 = vmatpush.msra.mxu0 0.0
          %331 = vmatpush.msra.mxu0 0.0
          %332 = vmatpush.msra.mxu0 %v314
          %333 = vmatpush.msra.mxu0 %v313
          %334 = vmatpush.msra.mxu0 %v312
          %335 = vmatpush.msra.mxu0 %v311
          %336 = vmatmul.f32.gmra.mxu0 %v318
          %v337 = vpop.f32.mrf.mxu0
          %v338 = vadd.f32 0.0, %v337
          %339 = vdwg.mxu0
          %vm340 = vcmp.gt.f32.partialorder %v338, 0.0
          %v341 = vmul.f32 %v338, 0.2
          %v342 = vsel %vm340, %v338, %v341
          %vm343 = vcmask 15360
          %v345 = vsel %vm343, %v342, 0
          %vm347 = vcmask 1041408
          %v349 = vsel %vm347, %v315, 0
          %351 = vmatpush.msra.mxu0 0.0
          %352 = vmatpush.msra.mxu0 0.0
          %353 = vmatpush.msra.mxu0 0.0
          %354 = vmatpush.msra.mxu0 0.0
          %355 = vmatpush.msra.mxu0 0.0
          %356 = vmatpush.msra.mxu0 0.0
          %357 = vmatpush.msra.mxu0 0.0
          %358 = vmatpush.msra.mxu0 0.0
          %359 = vmatpush.msra.mxu0 0.0
          %360 = vmatpush.msra.mxu0 0.0
          %361 = vmatpush.msra.mxu0 0.0
          %362 = vmatpush.msra.mxu0 0.0
          %363 = vmatpush.msra.mxu0 0.0
          %364 = vmatpush.msra.mxu0 0.0
          %365 = vmatpush.msra.mxu0 0.0
          %366 = vmatpush.msra.mxu0 %v349
          %367 = vmatmul.f32.gmra.mxu0 %v345
          %v368 = vpop.f32.mrf.mxu0
          %v369 = vadd.f32 0.0, %v368
          %370 = vdwg.mxu0
          %v372 = vrot.slane %v369, 1
          %v374 = vadd.f32 %v369, %v372
          %v375 = vxor.u32 %v374, 2147483648
          %v376 = vmul.f32 %v375, 1.442695
          %v377 = vpow.pop %v376
          %v378 = vadd.f32 %v377, 1.0
          %v379 = vrcp.pop %v378
          %v380 = vmul.f32 %v378, %v379
          %v381 = vsub.f32 1.0, %v380
          %v382 = vmul.f32 %v379, %v381
          %v383 = vadd.f32 %v379, %v382
          %vm384 = vweird.f32 %v378
          %vm385 = vweird.f32 %v379
          %vm386 = vmor %vm384, %vm385
          %v387 = vsel %vm386, %v379, %v383
          %v388 = vand.u32 2147483647, %v378
          %vm389 = vcmp.eq.f32.partialorder %v388, 8.507059e+37
          %v390 = vand.u32 %v378, 2147483648
          %v391 = vor.u32 1.1754944e-38, %v390
          %v392 = vsel %vm389, %v391, %v387
          %v393 = vmul.f32 1.0, %v392
          %vm394 = vcmask 253952
          %395 = vst.msk [vmem:[%s204] sm:$0x1] %vm394, %v393
        $region44: #{tpu_custom_call.1} parent=31 // pred_fallthru
          _
        %s396 = sand.u32 %s110, 1
        %s397 = scalar_lea.sflag [#allocation6], %s396
        %s398 = sand.u32 %s110, 1
        %s399 = scalar_lea.vmem [#allocation7], %s398
        // Predicated region
        $region45: #{tpu_custom_call.1} parent=31 // pred_check
          %p400 = pneg %p120
        $region46: #{tpu_custom_call.1} parent=31 // pred_check_branch
          %402 = sbr.rel (%p400) target = $region48
        $region47: #{tpu_custom_call.1} parent=31 // pred_region
          %404 = vsyncadd %s397, 0
          %s405 = scalar_lea.hbm %s3, %s24
          %s407 = sshll.u32 %s399, 4
          %s408 = int_to_ptr.vmem [resolvable:$true] %s407
          %s409 = sshll.u32 %s405, 4
          %s410 = int_to_ptr.hbm [resolvable:$true] %s409
          %412 = dma.vmem_to_hbm [thread:$0]  %s408, 16, %s410, %s397
        $region48: #{tpu_custom_call.1} parent=31 // pred_fallthru
          _
      $region32: #{tpu_custom_call.1} parent=5 // pred_fallthru
        _
      %p413 = scmp.le.s32.totalorder 2, %s15
      // Predicated region
      $region49: #{tpu_custom_call.1} parent=5 // pred_check
        %p414 = pneg %p413
      $region50: #{tpu_custom_call.1} parent=5 // pred_check_branch
        %416 = sbr.rel (%p414) target = $region52
      $region51: #{tpu_custom_call.1} parent=5 // pred_region
        %s417 = ssub.s32 %s15, 2
        // Predicated region
        $region53: #{tpu_custom_call.1} parent=51 // pred_check
          %p418 = pneg %p126
        $region54: #{tpu_custom_call.1} parent=51 // pred_check_branch
          %420 = sbr.rel (%p418) target = $region56
        $region55: #{tpu_custom_call.1} parent=51 // pred_region
          %s421 = sand.u32 %s111, 1
          %s422 = scalar_lea.sflag [#allocation6], %s421
          %s423 = sand.u32 %s111, 1
          %s424 = scalar_lea.vmem [#allocation7], %s423
          %426 = dma.done %s422, 16
        $region56: #{tpu_custom_call.1} parent=51 // pred_fallthru
          _
      $region52: #{tpu_custom_call.1} parent=5 // pred_fallthru
        _
    $region6: #{tpu_custom_call.1} parent=1 // loop_footer
      %s19 = sadd.s32 1, %s15
    $region7: #{tpu_custom_call.1} parent=1 // loop_footer_branch
      %14 = sbr.rel target = $region3
    $region8: #{tpu_custom_call.1} parent=1 // loop_exit
      _
    %427 = vsyncpa [#allocation5], 1
    %s428 = scalar_lea.sflag [#allocation5], 1
    %429 = vsyncpa %s428, 1
    %430 = vsyncpa [#allocation6], 1
    %s431 = scalar_lea.sflag [#allocation6], 1
    %432 = vsyncpa %s431, 1

</llo_original>
